<compile_context>
chip_gen: v7x
topology: tpu7x:2x2x1
jax: 0.10.0
libtpu: 0.0.40
codegen_flags: <defaults>
</compile_context>

<pallas_src>
import jax
import jax.numpy as jnp
import numpy as np
from jax.experimental import pallas as pl
from jax.experimental.pallas import tpu as pltpu

P_ROWS = 72    # packed parameter buffer rows
P_COLS = 128   # lane width
_MAX_TILE = 4096  # max batch rows per grid step (VMEM cost ~0.4 MiB incl. dbl-buffer)


def pack_params(w1, b1, w2, b2, w3, b3):
    """Pack all six parameters into one (72, 128) f32 buffer.

    Weights are stored as (in, out) (i.e. PyTorch weight.T) so the kernel
    computes x @ W with the batch on sublanes (natural row-major layout).
    Layout:
      rows 0:5,  cols 0:32 : W1 (5, 32)
      row  5,    cols 0:32 : b1
      row  6,    cols 0:32 : b2
      row  7,    cols 0:2  : b3          (cols 2:128 stay zero)
      rows 8:40, cols 0:32 : W2 (32, 32)
      rows 40:72,cols 0:2  : W3 (32, 2)  (cols 2:128 stay zero)
    """
    p = jnp.zeros((P_ROWS, P_COLS), jnp.float32)
    p = p.at[0:5, 0:32].set(w1)
    p = p.at[5, 0:32].set(b1)
    p = p.at[6, 0:32].set(b2)
    p = p.at[7, 0:2].set(b3)
    p = p.at[8:40, 0:32].set(w2)
    p = p.at[40:72, 0:2].set(w3)
    return p


def mlp_kernel(p_ref, x_ref, o_ref):
    x = x_ref[...]                     # (tb, 5), batch on sublanes
    w1 = p_ref[0:5, 0:32]              # (5, 32)
    b1 = p_ref[5:6, 0:32]              # (1, 32)
    b2 = p_ref[6:7, 0:32]              # (1, 32)
    b3 = p_ref[7:8, :]                 # (1, 128), cols 2:128 are zero
    w2 = p_ref[8:40, 0:32]             # (32, 32)
    w3 = p_ref[40:72, :]               # (32, 128), cols 2:128 are zero

    # Layer 1: Linear(5, 32) + ReLU
    h1 = jnp.maximum(
        jnp.dot(x, w1, preferred_element_type=jnp.float32) + b1, 0.0)
    # Layer 2: Linear(32, 32) + ReLU
    h2 = jnp.maximum(
        jnp.dot(h1, w2, preferred_element_type=jnp.float32) + b2, 0.0)
    # Layer 3: Linear(32, 2) + Tanh.  Computed on 128 (zero-padded) output
    # lanes -- same vreg/MXU cost as 2 lanes -- then the 2 real lanes are kept.
    h3 = jnp.dot(h2, w3, preferred_element_type=jnp.float32) + b3   # (tb, 128)
    o_ref[...] = jnp.tanh(h3[:, 0:2])                               # (tb, 2)


def _tile_plan(B, max_tile):
    """Pick (tile_rows, num_tiles).  Single tile for modest batches; an even
    number of ~max_tile-row tiles for large batches (so v7x's two TensorCores
    both get work under dimension_semantics=("parallel",))."""
    if B <= max_tile:
        return B, 1
    ntiles = pl.cdiv(B, max_tile)
    if ntiles % 2:
        ntiles += 1
    tb = pl.cdiv(B, ntiles)
    tb = pl.cdiv(tb, 8) * 8            # sublane multiple
    ntiles = pl.cdiv(B, tb)            # last tile may be partial (Pallas pads)
    return tb, ntiles


def pong_mlp(x, packed_params, *, max_tile=_MAX_TILE):
    """x: (B, 5) float32 -> (B, 2) float32.  No host-side relayout passes."""
    B = x.shape[0]
    tb, ntiles = _tile_plan(B, max_tile)
    return pl.pallas_call(
        mlp_kernel,
        out_shape=jax.ShapeDtypeStruct((B, 2), jnp.float32),
        grid=(ntiles,),
        in_specs=[
            # Single packed parameter block; constant block index keeps it
            # VMEM-resident and DMA'd exactly once across all batch tiles.
            pl.BlockSpec((P_ROWS, P_COLS), lambda i: (0, 0)),
            pl.BlockSpec((tb, 5), lambda i: (i, 0)),
        ],
        out_specs=pl.BlockSpec((tb, 2), lambda i: (i, 0)),
        compiler_params=pltpu.CompilerParams(
            dimension_semantics=("parallel",)),
    )(packed_params, x)


def xavier_uniform(key, fan_in, fan_out):
    # Matches torch.nn.init.xavier_uniform_ (gain=1): U(-a, a), a = sqrt(6/(fan_in+fan_out)).
    a = np.sqrt(6.0 / (fan_in + fan_out))
    # Stored as (fan_in, fan_out) so the math is x @ W (== PyTorch x @ W_pt.T).
    return jax.random.uniform(key, (fan_in, fan_out), jnp.float32, -a, a)


def reference(x, w1, b1, w2, b2, w3, b3):
    h = np.maximum(x @ w1 + b1, 0.0)
    h = np.maximum(h @ w2 + b2, 0.0)
    return np.tanh(h @ w3 + b3)


if __name__ == "__main__":
    key = jax.random.PRNGKey(0)
    kx1, kx2, k1, k2, k3 = jax.random.split(key, 5)

    # Xavier-uniform weights, zero biases (matches the PyTorch module init).
    w1 = xavier_uniform(k1, 5, 32)
    b1 = jnp.zeros((32,), jnp.float32)
    w2 = xavier_uniform(k2, 32, 32)
    b2 = jnp.zeros((32,), jnp.float32)
    w3 = xavier_uniform(k3, 32, 2)
    b3 = jnp.zeros((2,), jnp.float32)
    packed = pack_params(w1, b1, w2, b2, w3, b3)
    np_params = tuple(np.asarray(a) for a in (w1, b1, w2, b2, w3, b3))

    # (1) Tiny batch (typical Pong inference): single tile, grid = 1.
    x_small = jax.random.normal(kx1, (8, 5), jnp.float32)
    out_small = jax.block_until_ready(pong_mlp(x_small, packed))
    np.testing.assert_allclose(np.asarray(out_small),
                               reference(np.asarray(x_small), *np_params),
                               rtol=5e-4, atol=5e-4)

    # (2) Modest batch: still a single tile covering the whole batch.
    x_mid = jax.random.normal(kx2, (640, 5), jnp.float32)
    out_mid = jax.block_until_ready(pong_mlp(x_mid, packed))
    np.testing.assert_allclose(np.asarray(out_mid),
                               reference(np.asarray(x_mid), *np_params),
                               rtol=5e-4, atol=5e-4)

    # (3) Force the multi-tile path (even tile count + partial boundary block).
    x_multi = jax.random.normal(kx2, (650, 5), jnp.float32)
    out_multi = jax.block_until_ready(pong_mlp(x_multi, packed, max_tile=256))
    np.testing.assert_allclose(np.asarray(out_multi),
                               reference(np.asarray(x_multi), *np_params),
                               rtol=5e-4, atol=5e-4)

    print("KERNEL_OK")
</pallas_src>

<mosaic_0001>
module attributes {stable_mosaic.version = 11 : i64} {
  func.func @mlp_kernel(%arg0: i32, %arg1: memref<72x128xf32, #tpu.memory_space<vmem>>, %arg2: memref<8x5xf32, #tpu.memory_space<vmem>>, %arg3: memref<8x2xf32, #tpu.memory_space<vmem>>) attributes {dimension_semantics = [#tpu.dimension_semantics<parallel>], iteration_bounds = array<i64: 1>, scalar_prefetch = 0 : i64, scratch_operands = 0 : i64, tpu.core_type = #tpu.core_type<tc>, window_params = [{pipeline_mode = #tpu.pipeline_mode<synchronous>, transform_indices = @transform_0, window_bounds = array<i64: 72, 128>}, {transform_indices = @transform_1, window_bounds = array<i64: 8, 5>}, {transform_indices = @transform_2, window_bounds = array<i64: 8, 2>}]} {
    %c0 = arith.constant 0 : index
    %c0_0 = arith.constant 0 : index
    %0 = vector.load %arg2[%c0, %c0_0] : memref<8x5xf32, #tpu.memory_space<vmem>>, vector<8x5xf32>
    %c0_1 = arith.constant 0 : index
    %c0_2 = arith.constant 0 : index
    %1 = vector.load %arg1[%c0_1, %c0_2] : memref<72x128xf32, #tpu.memory_space<vmem>>, vector<5x32xf32>
    %c5 = arith.constant 5 : index
    %c0_3 = arith.constant 0 : index
    %2 = vector.load %arg1[%c5, %c0_3] : memref<72x128xf32, #tpu.memory_space<vmem>>, vector<1x32xf32>
    %c6 = arith.constant 6 : index
    %c0_4 = arith.constant 0 : index
    %3 = vector.load %arg1[%c6, %c0_4] : memref<72x128xf32, #tpu.memory_space<vmem>>, vector<1x32xf32>
    %c7 = arith.constant 7 : index
    %c0_5 = arith.constant 0 : index
    %4 = vector.load %arg1[%c7, %c0_5] : memref<72x128xf32, #tpu.memory_space<vmem>>, vector<1x128xf32>
    %c8 = arith.constant 8 : index
    %c0_6 = arith.constant 0 : index
    %5 = vector.load %arg1[%c8, %c0_6] : memref<72x128xf32, #tpu.memory_space<vmem>>, vector<32x32xf32>
    %c40 = arith.constant 40 : index
    %c0_7 = arith.constant 0 : index
    %6 = vector.load %arg1[%c40, %c0_7] : memref<72x128xf32, #tpu.memory_space<vmem>>, vector<32x128xf32>
    %cst = arith.constant dense<0.000000e+00> : vector<8x32xf32>
    %7 = tpu.matmul %0, %1, %cst {dimension_numbers = #tpu.dot_dimension_numbers<[1], [0], [0], [1], [0, 0, 1, 1], [], []>} : vector<8x5xf32>, vector<5x32xf32>, vector<8x32xf32> -> vector<8x32xf32>
    %8 = vector.broadcast %2 : vector<1x32xf32> to vector<8x32xf32>
    %9 = arith.addf %7, %8 : vector<8x32xf32>
    %cst_8 = arith.constant 0.000000e+00 : f32
    %10 = vector.broadcast %cst_8 : f32 to vector<8x32xf32>
    %11 = arith.maximumf %9, %10 : vector<8x32xf32>
    %cst_9 = arith.constant dense<0.000000e+00> : vector<8x32xf32>
    %12 = tpu.matmul %11, %5, %cst_9 {dimension_numbers = #tpu.dot_dimension_numbers<[1], [0], [0], [1], [0, 0, 1, 1], [], []>} : vector<8x32xf32>, vector<32x32xf32>, vector<8x32xf32> -> vector<8x32xf32>
    %13 = vector.broadcast %3 : vector<1x32xf32> to vector<8x32xf32>
    %14 = arith.addf %12, %13 : vector<8x32xf32>
    %cst_10 = arith.constant 0.000000e+00 : f32
    %15 = vector.broadcast %cst_10 : f32 to vector<8x32xf32>
    %16 = arith.maximumf %14, %15 : vector<8x32xf32>
    %cst_11 = arith.constant dense<0.000000e+00> : vector<8x128xf32>
    %17 = tpu.matmul %16, %6, %cst_11 {dimension_numbers = #tpu.dot_dimension_numbers<[1], [0], [0], [1], [0, 0, 1, 1], [], []>} : vector<8x32xf32>, vector<32x128xf32>, vector<8x128xf32> -> vector<8x128xf32>
    %18 = vector.broadcast %4 : vector<1x128xf32> to vector<8x128xf32>
    %19 = arith.addf %17, %18 : vector<8x128xf32>
    %20 = vector.extract_strided_slice %19 {offsets = [0, 0], sizes = [8, 2], strides = [1, 1]} : vector<8x128xf32> to vector<8x2xf32>
    %21 = math.tanh %20 : vector<8x2xf32>
    %c0_12 = arith.constant 0 : index
    %c0_13 = arith.constant 0 : index
    %22 = vector.load %arg3[%c0_12, %c0_13] : memref<8x2xf32, #tpu.memory_space<vmem>>, vector<8x2xf32>
    tpu.vector_store %arg3[%c0_12, %c0_13], %21 {strides = array<i32>} : memref<8x2xf32, #tpu.memory_space<vmem>>, vector<8x2xf32>,
    return
  }
  func.func @transform_0(%arg0: i32) -> (i32, i32) {
    %c0_i32 = arith.constant 0 : i32
    %c0_i32_0 = arith.constant 0 : i32
    %c0_i32_1 = arith.constant 0 : i32
    return %c0_i32, %c0_i32_0 : i32, i32
  }
  func.func @transform_1(%arg0: i32) -> (i32, i32) {
    %c0_i32 = arith.constant 0 : i32
    %c0_i32_0 = arith.constant 0 : i32
    return %arg0, %c0_i32 : i32, i32
  }
  func.func @transform_2(%arg0: i32) -> (i32, i32) {
    %c0_i32 = arith.constant 0 : i32
    %c0_i32_0 = arith.constant 0 : i32
    return %arg0, %c0_i32 : i32, i32
  }
}

</mosaic_0001>

<llo_original>
// kernel: tpu_custom_call.1
$region0: #{tpu_custom_call.1}
  #allocation0 [shape = 'u32[]', space=smem, size = 0x4, offset = 0x4, fixed_abs, tag = 'smem constant byte address 0x4 - core index']
  #allocation1 [shape = 'u32[144,128]{1,0:T(1,128)}', space=vmem, size = 0x12000, scoped, tag = 'internal scratch']
  %s0 = inlined_call_operand.hbm [shape: f32[72,128], index: 0, kind: input, shape index: {}]
  %s1 = inlined_call_operand.hbm [shape: f32[8,5], index: 1, kind: input, shape index: {}]
  %s2 = inlined_call_operand.vmem [shape: f32[8,2], index: 2, kind: output, shape index: {}]
  %s3 = sld [smem:[#allocation0]]
  $region26: #{tpu_custom_call.1} parent=0
    _
  %s5 = ssub.s32 1, %s3
  %s6 = scalar_select 0, %s5, %s3
  $region1: #{tpu_custom_call.1} parent=0
    #allocation2 [shape = 'u8[36864]{0}', space=vmem, size = 0x9000, scoped, tag = 'input window, operand 0, single buffered']
    #allocation3 [shape = 's32[1]{0}', space=sflag, size = 0x4, scoped, tag = 'scoped memory for tpu_custom_call.1']
    #allocation4 [shape = 'u8[4096]{0}', space=vmem, size = 0x1000, scoped, tag = 'input window, operand 1, single buffered']
    #allocation5 [shape = 's32[1]{0}', space=sflag, size = 0x4, scoped, tag = 'scoped memory for tpu_custom_call.1']
    %7 = vsyncpa [#allocation3], 0
    %8 = vsyncpa [#allocation5], 0
    // Predicated region
    $region2: #{tpu_custom_call.1} parent=1 // pred_check
      _
    $region3: #{tpu_custom_call.1} parent=1 // pred_check_branch
      %10 = sbr.rel (0) target = $region5
    $region4: #{tpu_custom_call.1} parent=1 // pred_region
      %s12 = ssub.s32 1152, 1152
      %13 = vsyncadd [#allocation3], %s12
      %s14 = sshll.u32 [#allocation2], 4
      %s15 = int_to_ptr.vmem [resolvable:$true] %s14
      %20 = dma.hbm_to_vmem [thread:$0]  %s0, 1152, %s15, [#allocation3], 128, 128, 8
    $region5: #{tpu_custom_call.1} parent=1 // pred_fallthru
      _
    // Predicated region
    $region6: #{tpu_custom_call.1} parent=1 // pred_check
      _
    $region7: #{tpu_custom_call.1} parent=1 // pred_check_branch
      %22 = sbr.rel (0) target = $region9
    $region8: #{tpu_custom_call.1} parent=1 // pred_region
      %s24 = ssub.s32 128, 128
      %25 = vsyncadd [#allocation5], %s24
      %s27 = sshll.u32 [#allocation4], 4
      %s28 = int_to_ptr.vmem [resolvable:$true] %s27
      %30 = dma.hbm_to_vmem [thread:$0]  %s1, 128, %s28, [#allocation5]
    $region9: #{tpu_custom_call.1} parent=1 // pred_fallthru
      _
    // Predicated region
    $region10: #{tpu_custom_call.1} parent=1 // pred_check
      _
    $region11: #{tpu_custom_call.1} parent=1 // pred_check_branch
      %32 = sbr.rel (0) target = $region13
    $region12: #{tpu_custom_call.1} parent=1 // pred_region
      %33 = dma.done [#allocation3], 1152
    $region13: #{tpu_custom_call.1} parent=1 // pred_fallthru
      _
    // Predicated region
    $region14: #{tpu_custom_call.1} parent=1 // pred_check
      _
    $region15: #{tpu_custom_call.1} parent=1 // pred_check_branch
      %35 = sbr.rel (0) target = $region17
    $region16: #{tpu_custom_call.1} parent=1 // pred_region
      %36 = dma.done [#allocation5], 128
    $region17: #{tpu_custom_call.1} parent=1 // pred_fallthru
      _
    %v37 = vld [vmem:[#allocation4] sm:$0xff]
    %v38 = vld [vmem:[#allocation2] sm:$0x1f]
    %v39 = vld [vmem:[#allocation2 + $0x5] sm:$0x1]
    %v40 = vld [vmem:[#allocation2 + $0x6] sm:$0x1]
    %v41 = vld [vmem:[#allocation2 + $0x7] sm:$0x1]
    %v42 = vld [vmem:[#allocation2 + $0x8] sm:$0xff]
    %v43 = vld [vmem:[#allocation2 + $0x10] sm:$0xff]
    %v44 = vld [vmem:[#allocation2 + $0x18] sm:$0xff]
    %v45 = vld [vmem:[#allocation2 + $0x20] sm:$0xff]
    %v46 = vld [vmem:[#allocation2 + $0x28] sm:$0xff]
    %v47 = vld [vmem:[#allocation2 + $0x30] sm:$0xff]
    %v48 = vld [vmem:[#allocation2 + $0x38] sm:$0xff]
    %v49 = vld [vmem:[#allocation2 + $0x40] sm:$0xff]
    %v50 = vlaneseq
    %v51 = vshrl.u32 %v50, 7
    %v52 = vsub.s32 0, %v51
    %v53 = vrot.slane %v39, %v52
    %vm54 = vcmask 39936
    %v56 = vsel %vm54, %v37, 0
    %vm58 = vcmask 1044480
    %v60 = vsel %vm58, %v38, 0
    %62 = vmatprep.subr.mxu0 0.0
    %63 = vmatpush1.msra.mxu0 %v60
    %64 = vmatprep.subr.mxu0 0.0
    %65 = vmatpush1.msra.mxu0 0.0
    %66 = vmatprep.subr.mxu0 0.0
    %67 = vmatpush1.msra.mxu0 0.0
    %68 = vmatprep.subr.mxu0 0.0
    %69 = vmatpush1.msra.mxu0 0.0
    %70 = vmatprep.subr.mxu0 0.0
    %71 = vmatpush1.msra.mxu0 0.0
    %72 = vmatprep.subr.mxu0 0.0
    %73 = vmatpush1.msra.mxu0 0.0
    %74 = vmatprep.subr.mxu0 0.0
    %75 = vmatpush1.msra.mxu0 0.0
    %76 = vmatprep.subr.mxu0 0.0
    %77 = vmatpush1.msra.mxu0 0.0
    %78 = vmatprep.subr.mxu0 0.0
    %79 = vmatpush1.msra.mxu0 0.0
    %80 = vmatprep.subr.mxu0 0.0
    %81 = vmatpush1.msra.mxu0 0.0
    %82 = vmatprep.subr.mxu0 0.0
    %83 = vmatpush1.msra.mxu0 0.0
    %84 = vmatprep.subr.mxu0 0.0
    %85 = vmatpush1.msra.mxu0 0.0
    %86 = vmatprep.subr.mxu0 0.0
    %87 = vmatpush1.msra.mxu0 0.0
    %88 = vmatprep.subr.mxu0 0.0
    %89 = vmatpush1.msra.mxu0 0.0
    %90 = vmatprep.subr.mxu0 0.0
    %91 = vmatpush1.msra.mxu0 0.0
    %92 = vmatprep.subr.mxu0 0.0
    %93 = vmatpush1.msra.mxu0 0.0
    %94 = vmatprep.subr.mxu0 0.0
    %95 = vmatpush1.msra.mxu0 0.0
    %96 = vmatprep.subr.mxu0 0.0
    %97 = vmatpush1.msra.mxu0 0.0
    %98 = vmatprep.subr.mxu0 0.0
    %99 = vmatpush1.msra.mxu0 0.0
    %100 = vmatprep.subr.mxu0 0.0
    %101 = vmatpush1.msra.mxu0 0.0
    %102 = vmatprep.subr.mxu0 0.0
    %103 = vmatpush1.msra.mxu0 0.0
    %104 = vmatprep.subr.mxu0 0.0
    %105 = vmatpush1.msra.mxu0 0.0
    %106 = vmatprep.subr.mxu0 0.0
    %107 = vmatpush1.msra.mxu0 0.0
    %108 = vmatprep.subr.mxu0 0.0
    %109 = vmatpush1.msra.mxu0 0.0
    %110 = vmatprep.subr.mxu0 0.0
    %111 = vmatpush1.msra.mxu0 0.0
    %112 = vmatprep.subr.mxu0 0.0
    %113 = vmatpush1.msra.mxu0 0.0
    %114 = vmatprep.subr.mxu0 0.0
    %115 = vmatpush1.msra.mxu0 0.0
    %116 = vmatprep.subr.mxu0 0.0
    %117 = vmatpush1.msra.mxu0 0.0
    %118 = vmatprep.subr.mxu0 0.0
    %119 = vmatpush1.msra.mxu0 0.0
    %120 = vmatprep.subr.mxu0 0.0
    %121 = vmatpush1.msra.mxu0 0.0
    %122 = vmatprep.subr.mxu0 0.0
    %123 = vmatpush1.msra.mxu0 0.0
    %124 = vmatprep.subr.mxu0 0.0
    %125 = vmatpush1.msra.mxu0 0.0
    %126 = vmatprep.mubr.f32.mxu0 0.0
    %127 = vmatmul.mubr.f32.gmra.mrb[0].mxu0 %v56
    %v128 = vpop.f32.mrb[0].mxu0
    %v129 = vadd.f32 %v53, %v128
    %v130 = vpop.f32.mrb[0].mxu0
    %131 = vdwg.mxu0
    %v132 = vmax.f32 %v129, 0.0
    %v133 = vlaneseq
    %v134 = vshrl.u32 %v133, 7
    %v135 = vsub.s32 0, %v134
    %v136 = vrot.slane %v40, %v135
    %vm137 = vcmask 261120
    %v139 = vsel %vm137, %v132, 0
    %141 = vmatprep.subr.mxu0 0.0
    %142 = vmatpush1.msra.mxu0 %v42
    %143 = vmatprep.subr.mxu0 0.0
    %144 = vmatpush1.msra.mxu0 %v43
    %145 = vmatprep.subr.mxu0 0.0
    %146 = vmatpush1.msra.mxu0 %v44
    %147 = vmatprep.subr.mxu0 0.0
    %148 = vmatpush1.msra.mxu0 %v45
    %149 = vmatprep.subr.mxu0 0.0
    %150 = vmatpush1.msra.mxu0 0.0
    %151 = vmatprep.subr.mxu0 0.0
    %152 = vmatpush1.msra.mxu0 0.0
    %153 = vmatprep.subr.mxu0 0.0
    %154 = vmatpush1.msra.mxu0 0.0
    %155 = vmatprep.subr.mxu0 0.0
    %156 = vmatpush1.msra.mxu0 0.0
    %157 = vmatprep.subr.mxu0 0.0
    %158 = vmatpush1.msra.mxu0 0.0
    %159 = vmatprep.subr.mxu0 0.0
    %160 = vmatpush1.msra.mxu0 0.0
    %161 = vmatprep.subr.mxu0 0.0
    %162 = vmatpush1.msra.mxu0 0.0
    %163 = vmatprep.subr.mxu0 0.0
    %164 = vmatpush1.msra.mxu0 0.0
    %165 = vmatprep.subr.mxu0 0.0
    %166 = vmatpush1.msra.mxu0 0.0
    %167 = vmatprep.subr.mxu0 0.0
    %168 = vmatpush1.msra.mxu0 0.0
    %169 = vmatprep.subr.mxu0 0.0
    %170 = vmatpush1.msra.mxu0 0.0
    %171 = vmatprep.subr.mxu0 0.0
    %172 = vmatpush1.msra.mxu0 0.0
    %173 = vmatprep.subr.mxu0 0.0
    %174 = vmatpush1.msra.mxu0 0.0
    %175 = vmatprep.subr.mxu0 0.0
    %176 = vmatpush1.msra.mxu0 0.0
    %177 = vmatprep.subr.mxu0 0.0
    %178 = vmatpush1.msra.mxu0 0.0
    %179 = vmatprep.subr.mxu0 0.0
    %180 = vmatpush1.msra.mxu0 0.0
    %181 = vmatprep.subr.mxu0 0.0
    %182 = vmatpush1.msra.mxu0 0.0
    %183 = vmatprep.subr.mxu0 0.0
    %184 = vmatpush1.msra.mxu0 0.0
    %185 = vmatprep.subr.mxu0 0.0
    %186 = vmatpush1.msra.mxu0 0.0
    %187 = vmatprep.subr.mxu0 0.0
    %188 = vmatpush1.msra.mxu0 0.0
    %189 = vmatprep.subr.mxu0 0.0
    %190 = vmatpush1.msra.mxu0 0.0
    %191 = vmatprep.subr.mxu0 0.0
    %192 = vmatpush1.msra.mxu0 0.0
    %193 = vmatprep.subr.mxu0 0.0
    %194 = vmatpush1.msra.mxu0 0.0
    %195 = vmatprep.subr.mxu0 0.0
    %196 = vmatpush1.msra.mxu0 0.0
    %197 = vmatprep.subr.mxu0 0.0
    %198 = vmatpush1.msra.mxu0 0.0
    %199 = vmatprep.subr.mxu0 0.0
    %200 = vmatpush1.msra.mxu0 0.0
    %201 = vmatprep.subr.mxu0 0.0
    %202 = vmatpush1.msra.mxu0 0.0
    %203 = vmatprep.subr.mxu0 0.0
    %204 = vmatpush1.msra.mxu0 0.0
    %205 = vmatprep.mubr.f32.mxu0 0.0
    %206 = vmatmul.mubr.f32.gmra.mrb[0].mxu0 %v139
    %v207 = vpop.f32.mrb[0].mxu0
    %v208 = vadd.f32 %v136, %v207
    %v209 = vpop.f32.mrb[0].mxu0
    %210 = vdwg.mxu0
    %v211 = vmax.f32 %v208, 0.0
    %v212 = vlaneseq
    %v213 = vshrl.u32 %v212, 7
    %v214 = vsub.s32 0, %v213
    %v215 = vrot.slane %v41, %v214
    %v217 = vsel %vm137, %v211, 0
    %219 = vmatprep.subr.mxu0 0.0
    %220 = vmatpush1.msra.mxu0 %v46
    %221 = vmatprep.subr.mxu0 0.0
    %222 = vmatpush1.msra.mxu0 %v47
    %223 = vmatprep.subr.mxu0 0.0
    %224 = vmatpush1.msra.mxu0 %v48
    %225 = vmatprep.subr.mxu0 0.0
    %226 = vmatpush1.msra.mxu0 %v49
    %227 = vmatprep.subr.mxu0 0.0
    %228 = vmatpush1.msra.mxu0 0.0
    %229 = vmatprep.subr.mxu0 0.0
    %230 = vmatpush1.msra.mxu0 0.0
    %231 = vmatprep.subr.mxu0 0.0
    %232 = vmatpush1.msra.mxu0 0.0
    %233 = vmatprep.subr.mxu0 0.0
    %234 = vmatpush1.msra.mxu0 0.0
    %235 = vmatprep.subr.mxu0 0.0
    %236 = vmatpush1.msra.mxu0 0.0
    %237 = vmatprep.subr.mxu0 0.0
    %238 = vmatpush1.msra.mxu0 0.0
    %239 = vmatprep.subr.mxu0 0.0
    %240 = vmatpush1.msra.mxu0 0.0
    %241 = vmatprep.subr.mxu0 0.0
    %242 = vmatpush1.msra.mxu0 0.0
    %243 = vmatprep.subr.mxu0 0.0
    %244 = vmatpush1.msra.mxu0 0.0
    %245 = vmatprep.subr.mxu0 0.0
    %246 = vmatpush1.msra.mxu0 0.0
    %247 = vmatprep.subr.mxu0 0.0
    %248 = vmatpush1.msra.mxu0 0.0
    %249 = vmatprep.subr.mxu0 0.0
    %250 = vmatpush1.msra.mxu0 0.0
    %251 = vmatprep.subr.mxu0 0.0
    %252 = vmatpush1.msra.mxu0 0.0
    %253 = vmatprep.subr.mxu0 0.0
    %254 = vmatpush1.msra.mxu0 0.0
    %255 = vmatprep.subr.mxu0 0.0
    %256 = vmatpush1.msra.mxu0 0.0
    %257 = vmatprep.subr.mxu0 0.0
    %258 = vmatpush1.msra.mxu0 0.0
    %259 = vmatprep.subr.mxu0 0.0
    %260 = vmatpush1.msra.mxu0 0.0
    %261 = vmatprep.subr.mxu0 0.0
    %262 = vmatpush1.msra.mxu0 0.0
    %263 = vmatprep.subr.mxu0 0.0
    %264 = vmatpush1.msra.mxu0 0.0
    %265 = vmatprep.subr.mxu0 0.0
    %266 = vmatpush1.msra.mxu0 0.0
    %267 = vmatprep.subr.mxu0 0.0
    %268 = vmatpush1.msra.mxu0 0.0
    %269 = vmatprep.subr.mxu0 0.0
    %270 = vmatpush1.msra.mxu0 0.0
    %271 = vmatprep.subr.mxu0 0.0
    %272 = vmatpush1.msra.mxu0 0.0
    %273 = vmatprep.subr.mxu0 0.0
    %274 = vmatpush1.msra.mxu0 0.0
    %275 = vmatprep.subr.mxu0 0.0
    %276 = vmatpush1.msra.mxu0 0.0
    %277 = vmatprep.subr.mxu0 0.0
    %278 = vmatpush1.msra.mxu0 0.0
    %279 = vmatprep.subr.mxu0 0.0
    %280 = vmatpush1.msra.mxu0 0.0
    %281 = vmatprep.subr.mxu0 0.0
    %282 = vmatpush1.msra.mxu0 0.0
    %283 = vmatprep.mubr.f32.mxu0 0.0
    %284 = vmatmul.mubr.f32.gmra.mrb[0].mxu0 %v217
    %v285 = vpop.f32.mrb[0].mxu0
    %v286 = vadd.f32 %v215, %v285
    %v287 = vpop.f32.mrb[0].mxu0
    %288 = vdwg.mxu0
    %v289 = vtanh.pop %v286
    %vm290 = vcmask 15360
    %291 = vst.msk [vmem:[%s2] sm:$0xff] %vm290, %v289
    // Predicated region
    $region18: #{tpu_custom_call.1} parent=1 // pred_check
      _
    $region19: #{tpu_custom_call.1} parent=1 // pred_check_branch
      %293 = sbr.rel (0) target = $region21
    $region20: #{tpu_custom_call.1} parent=1 // pred_region
      _
    $region21: #{tpu_custom_call.1} parent=1 // pred_fallthru
      _
    // Predicated region
    $region22: #{tpu_custom_call.1} parent=1 // pred_check
      _
    $region23: #{tpu_custom_call.1} parent=1 // pred_check_branch
      %295 = sbr.rel (0) target = $region25
    $region24: #{tpu_custom_call.1} parent=1 // pred_region
      _
    $region25: #{tpu_custom_call.1} parent=1 // pred_fallthru
      _
    %296 = vsyncpa [#allocation3], 1
    %297 = vsyncpa [#allocation5], 1

</llo_original>
